<compile_context>
chip_gen: v7x
topology: tpu7x:2x2x1
jax: 0.10.0
libtpu: 0.0.40
codegen_flags: <defaults>
</compile_context>

<pallas_src>
import jax
import jax.numpy as jnp
from jax.experimental import pallas as pl
from jax.experimental.pallas import tpu as pltpu


def surface_mlp_kernel(x_ref, w1_ref, b1_ref, w2_ref, b2_ref, w3_ref, b3_ref, o_ref):
    """Fused forward pass for one batch tile.

    x_ref : (tile_b, D)      bf16 (or f32)
    w1_ref: (D, 128)  bf16   b1_ref: (1, 128) f32
    w2_ref: (128, 64) bf16   b2_ref: (1, 64)  f32
    w3_ref: (1, 64)   f32    (row vector -> layer 3 runs on the VPU/XLU, not the MXU)
    b3_ref: (1,)      f32    scalar in SMEM
    o_ref : (tile_b // 128, 128) f32   lane-dense output layout
    """
    x = x_ref[...]
    # Layer 1 (MXU, f32 accumulation) + bias + ReLU (f32 on the VPU).
    h1 = jnp.dot(x, w1_ref[...], preferred_element_type=jnp.float32) + b1_ref[...]
    h1 = jnp.maximum(h1, 0.0).astype(w2_ref.dtype)      # bf16 for the next MXU matmul
    # Layer 2 (MXU).
    h2 = jnp.dot(h1, w2_ref[...], preferred_element_type=jnp.float32) + b2_ref[...]
    h2 = jnp.maximum(h2, 0.0)                            # (tile_b, 64) f32
    # Layer 3 (64 -> 1): VPU multiply + XLU lane reduction; the MXU stays on layers 1/2.
    out_col = jnp.sum(h2 * w3_ref[...], axis=-1, keepdims=True) + b3_ref[0]  # (tile_b, 1)
    # Lane-dense store: relayout the per-row column into (tile_b//128, 128) so the
    # writeback uses full unmasked vector stores (XLU has slack; data is tiny).
    o_ref[...] = out_col.reshape(o_ref.shape).astype(o_ref.dtype)


def _round_up(x, m):
    return ((x + m - 1) // m) * m


def _cdiv(a, b):
    return (a + b - 1) // b


def _vmem_plan():
    """Generation-aware (vmem_limit_bytes, per-tile working-set budget)."""
    try:
        cap = pltpu.get_tpu_info().vmem_capacity_bytes
    except Exception:
        cap = 64 * 1024 * 1024                       # conservative (v7x-sized) fallback
    if cap >= 100 * 1024 * 1024:                     # v5e / v6e: 128 MiB VMEM per core
        return 64 * 1024 * 1024, 40 * 1024 * 1024
    return 40 * 1024 * 1024, 20 * 1024 * 1024        # v7x: 64 MiB VMEM per core


def _pick_tile_b(B, per_row_bytes, budget_bytes, cap=8192):
    """Batch-tile size: multiple of 128 (1024 when multi-step), VMEM-budget aware,
    amortizes per-grid-step overhead, and keeps the grid splittable across v7x's
    two TensorCores for large batches."""
    b_pad = _round_up(max(B, 1), 128)
    tile = min(cap, budget_bytes // max(per_row_bytes, 1))
    tile = max(1024, (tile // 1024) * 1024)
    if b_pad < 2048:
        return b_pad                  # small batch: one grid step covers everything
    # Large batch: >= 2 steps (ideally >= 4) for v7x megacore, never < 1024 rows/step.
    steps_wanted = max(2, min(8, b_pad // 1024))
    tile_for_steps = max(1024, (_cdiv(b_pad, steps_wanted) // 1024) * 1024)
    return min(tile, tile_for_steps)


def surface_model_forward(x, params, *, tile_b=None, use_bf16=True):
    """x: (B, D) float32.  params: w1 (D,128), b1 (1,128), w2 (128,64), b2 (1,64),
    w3 (64,1), b3 (1,1) -- weights stored (in, out) so each layer is x @ W + b.

    use_bf16=True (default, documented accuracy trade of ~1e-2 abs vs f32) runs the
    two MXU matmuls in bf16 with f32 accumulation; set False for an f32 MXU path.
    """
    B, D = x.shape
    H1 = params["w1"].shape[1]
    H2 = params["w2"].shape[1]
    assert params["w3"].shape == (H2, 1), "SurfaceModel has a scalar output"

    in_dt = jnp.bfloat16 if use_bf16 else jnp.float32
    itm = jnp.dtype(in_dt).itemsize
    vmem_limit, budget = _vmem_plan()

    if tile_b is None:
        # x block (double-buffered) + f32/bf16 h1 + f32 h2 temps + output, per row.
        per_row = 2 * D * itm + H1 * (4 + itm) + 2 * H2 * 4 + 8
        tile_b = _pick_tile_b(B, per_row, budget)
    tile_b = max(128, (tile_b // 128) * 128)

    Bp = _round_up(_round_up(B, 128), tile_b)
    grid = (Bp // tile_b,)

    x_in = x.astype(in_dt)
    if Bp != B:
        # Zero rows are computed and sliced off afterwards (finite, harmless).
        x_in = jnp.pad(x_in, ((0, Bp - B), (0, 0)))

    w1 = params["w1"].astype(in_dt)
    w2 = params["w2"].astype(in_dt)
    b1 = params["b1"].reshape(1, H1).astype(jnp.float32)
    b2 = params["b2"].reshape(1, H2).astype(jnp.float32)
    w3_row = params["w3"].reshape(1, H2).astype(jnp.float32)   # (1, 64) row for the VPU
    b3 = params["b3"].reshape(1).astype(jnp.float32)           # scalar, lives in SMEM

    flops = 2 * Bp * (D * H1 + H1 * H2 + H2)
    bytes_accessed = int(
        x_in.size * x_in.dtype.itemsize
        + w1.size * w1.dtype.itemsize
        + w2.size * w2.dtype.itemsize
        + (H1 + H2 + H2 + 1) * 4
        + Bp * 4
    )

    out2d = pl.pallas_call(
        surface_mlp_kernel,
        out_shape=jax.ShapeDtypeStruct((Bp // 128, 128), jnp.float32),
        grid_spec=pltpu.PrefetchScalarGridSpec(
            num_scalar_prefetch=0,
            grid=grid,
            in_specs=[
                # batch-tiled activations
                pl.BlockSpec((tile_b, D), lambda i: (i, 0)),
                # weights / biases: same full block every step (stay resident in VMEM)
                pl.BlockSpec((D, H1), lambda i: (0, 0)),
                pl.BlockSpec((1, H1), lambda i: (0, 0)),
                pl.BlockSpec((H1, H2), lambda i: (0, 0)),
                pl.BlockSpec((1, H2), lambda i: (0, 0)),
                pl.BlockSpec((1, H2), lambda i: (0, 0)),
                # b3: single scalar via SMEM (no padded VMEM block, no extra DMA buffer)
                pl.BlockSpec(memory_space=pltpu.MemorySpace.SMEM),
            ],
            out_specs=pl.BlockSpec((tile_b // 128, 128), lambda i: (i, 0)),
        ),
        compiler_params=pltpu.CompilerParams(
            dimension_semantics=("parallel",),
            vmem_limit_bytes=vmem_limit,
        ),
        cost_estimate=pl.CostEstimate(
            flops=int(flops), transcendentals=0, bytes_accessed=bytes_accessed
        ),
    )(x_in, w1, b1, w2, b2, w3_row, b3)

    # Lane-dense (Bp//128, 128) -> (B, 1)
    return out2d.reshape(Bp, 1)[:B]


def init_params(key, input_dim, h1=128, h2=64, out=1):
    """Deterministic synthetic init (PyTorch-Linear-like uniform fan-in bounds)."""
    ks = jax.random.split(key, 6)

    def lin(kw, kb, fan_in, fan_out):
        bound = 1.0 / jnp.sqrt(fan_in)
        # stored as (in, out) so the kernel computes x @ W
        w = jax.random.uniform(kw, (fan_in, fan_out), jnp.float32, -bound, bound)
        b = jax.random.uniform(kb, (1, fan_out), jnp.float32, -bound, bound)
        return w, b

    w1, b1 = lin(ks[0], ks[1], input_dim, h1)
    w2, b2 = lin(ks[2], ks[3], h1, h2)
    w3, b3 = lin(ks[4], ks[5], h2, out)
    return {"w1": w1, "b1": b1, "w2": w2, "b2": b2, "w3": w3, "b3": b3}


def reference_forward(x, p):
    h1 = jnp.maximum(x @ p["w1"] + p["b1"], 0.0)
    h2 = jnp.maximum(h1 @ p["w2"] + p["b2"], 0.0)
    return h2 @ p["w3"] + p["b3"]


if __name__ == "__main__":
    key = jax.random.PRNGKey(0)
    k_x, k_p = jax.random.split(key)

    B, D = 16, 32  # small synthetic shapes: batch=16, input_dim=32
    x = jax.random.normal(k_x, (B, D), jnp.float32)
    params = init_params(k_p, D)

    out = surface_model_forward(x, params)        # tile_b auto-derived (grid=(1,) here)
    out = jax.block_until_ready(out)

    ref = reference_forward(x, params)            # f32 reference
    assert out.shape == (B, 1), out.shape
    # bf16 matmul inputs (f32 accumulation) -> loosened tolerance vs f32 reference
    assert jnp.allclose(out, ref, atol=3e-2, rtol=3e-2), "mismatch vs reference"

    print("KERNEL_OK")
</pallas_src>

<mosaic_0001>
module attributes {stable_mosaic.version = 11 : i64} {
  func.func @surface_mlp_kernel(%arg0: i32, %arg1: memref<128x32xbf16, #tpu.memory_space<vmem>>, %arg2: memref<32x128xbf16, #tpu.memory_space<vmem>>, %arg3: memref<1x128xf32, #tpu.memory_space<vmem>>, %arg4: memref<128x64xbf16, #tpu.memory_space<vmem>>, %arg5: memref<1x64xf32, #tpu.memory_space<vmem>>, %arg6: memref<1x64xf32, #tpu.memory_space<vmem>>, %arg7: memref<1xf32, #tpu.memory_space<smem>>, %arg8: memref<1x128xf32, #tpu.memory_space<vmem>>) attributes {dimension_semantics = [#tpu.dimension_semantics<parallel>], iteration_bounds = array<i64: 1>, scalar_prefetch = 0 : i64, scratch_operands = 0 : i64, tpu.core_type = #tpu.core_type<tc>, window_params = [{transform_indices = @transform_0, window_bounds = array<i64: 128, 32>}, {pipeline_mode = #tpu.pipeline_mode<synchronous>, transform_indices = @transform_1, window_bounds = array<i64: 32, 128>}, {pipeline_mode = #tpu.pipeline_mode<synchronous>, transform_indices = @transform_2, window_bounds = array<i64: 1, 128>}, {pipeline_mode = #tpu.pipeline_mode<synchronous>, transform_indices = @transform_3, window_bounds = array<i64: 128, 64>}, {pipeline_mode = #tpu.pipeline_mode<synchronous>, transform_indices = @transform_4, window_bounds = array<i64: 1, 64>}, {pipeline_mode = #tpu.pipeline_mode<synchronous>, transform_indices = @transform_5, window_bounds = array<i64: 1, 64>}, {transform_indices = @transform_6, window_bounds = array<i64: 1>}, {transform_indices = @transform_7, window_bounds = array<i64: 1, 128>}]} {
    %c0 = arith.constant 0 : index
    %c0_0 = arith.constant 0 : index
    %0 = vector.load %arg1[%c0, %c0_0] : memref<128x32xbf16, #tpu.memory_space<vmem>>, vector<128x32xbf16>
    %c0_1 = arith.constant 0 : index
    %c0_2 = arith.constant 0 : index
    %1 = vector.load %arg2[%c0_1, %c0_2] : memref<32x128xbf16, #tpu.memory_space<vmem>>, vector<32x128xbf16>
    %cst = arith.constant dense<0.000000e+00> : vector<128x128xf32>
    %2 = tpu.matmul %0, %1, %cst {dimension_numbers = #tpu.dot_dimension_numbers<[1], [0], [0], [1], [0, 0, 1, 1], [], []>} : vector<128x32xbf16>, vector<32x128xbf16>, vector<128x128xf32> -> vector<128x128xf32>
    %c0_3 = arith.constant 0 : index
    %c0_4 = arith.constant 0 : index
    %3 = vector.load %arg3[%c0_3, %c0_4] : memref<1x128xf32, #tpu.memory_space<vmem>>, vector<1x128xf32>
    %4 = vector.broadcast %3 : vector<1x128xf32> to vector<128x128xf32>
    %5 = arith.addf %2, %4 : vector<128x128xf32>
    %cst_5 = arith.constant 0.000000e+00 : f32
    %6 = vector.broadcast %cst_5 : f32 to vector<128x128xf32>
    %7 = arith.maximumf %5, %6 : vector<128x128xf32>
    %8 = arith.truncf %7 : vector<128x128xf32> to vector<128x128xbf16>
    %c0_6 = arith.constant 0 : index
    %c0_7 = arith.constant 0 : index
    %9 = vector.load %arg4[%c0_6, %c0_7] : memref<128x64xbf16, #tpu.memory_space<vmem>>, vector<128x64xbf16>
    %cst_8 = arith.constant dense<0.000000e+00> : vector<128x64xf32>
    %10 = tpu.matmul %8, %9, %cst_8 {dimension_numbers = #tpu.dot_dimension_numbers<[1], [0], [0], [1], [0, 0, 1, 1], [], []>} : vector<128x128xbf16>, vector<128x64xbf16>, vector<128x64xf32> -> vector<128x64xf32>
    %c0_9 = arith.constant 0 : index
    %c0_10 = arith.constant 0 : index
    %11 = vector.load %arg5[%c0_9, %c0_10] : memref<1x64xf32, #tpu.memory_space<vmem>>, vector<1x64xf32>
    %12 = vector.broadcast %11 : vector<1x64xf32> to vector<128x64xf32>
    %13 = arith.addf %10, %12 : vector<128x64xf32>
    %cst_11 = arith.constant 0.000000e+00 : f32
    %14 = vector.broadcast %cst_11 : f32 to vector<128x64xf32>
    %15 = arith.maximumf %13, %14 : vector<128x64xf32>
    %c0_12 = arith.constant 0 : index
    %c0_13 = arith.constant 0 : index
    %16 = vector.load %arg6[%c0_12, %c0_13] : memref<1x64xf32, #tpu.memory_space<vmem>>, vector<1x64xf32>
    %17 = vector.broadcast %16 : vector<1x64xf32> to vector<128x64xf32>
    %18 = arith.mulf %15, %17 : vector<128x64xf32>
    %cst_14 = arith.constant dense<0.000000e+00> : vector<128xf32>
    %19 = vector.multi_reduction <add>, %18, %cst_14 [1] : vector<128x64xf32> to vector<128xf32>
    %20 = vector.shape_cast %19 : vector<128xf32> to vector<128x1xf32>
    %c0_15 = arith.constant 0 : index
    %21 = memref.load %arg7[%c0_15] : memref<1xf32, #tpu.memory_space<smem>>
    %22 = vector.broadcast %21 : f32 to vector<128x1xf32>
    %23 = arith.addf %20, %22 : vector<128x1xf32>
    %24 = vector.shape_cast %23 : vector<128x1xf32> to vector<1x128xf32>
    %c0_16 = arith.constant 0 : index
    %c0_17 = arith.constant 0 : index
    %25 = vector.load %arg8[%c0_16, %c0_17] : memref<1x128xf32, #tpu.memory_space<vmem>>, vector<1x128xf32>
    tpu.vector_store %arg8[%c0_16, %c0_17], %24 {strides = array<i32>} : memref<1x128xf32, #tpu.memory_space<vmem>>, vector<1x128xf32>,
    return
  }
  func.func @transform_0(%arg0: i32) -> (i32, i32) {
    %c0_i32 = arith.constant 0 : i32
    %c0_i32_0 = arith.constant 0 : i32
    return %arg0, %c0_i32 : i32, i32
  }
  func.func @transform_1(%arg0: i32) -> (i32, i32) {
    %c0_i32 = arith.constant 0 : i32
    %c0_i32_0 = arith.constant 0 : i32
    %c0_i32_1 = arith.constant 0 : i32
    return %c0_i32, %c0_i32_0 : i32, i32
  }
  func.func @transform_2(%arg0: i32) -> (i32, i32) {
    %c0_i32 = arith.constant 0 : i32
    %c0_i32_0 = arith.constant 0 : i32
    %c0_i32_1 = arith.constant 0 : i32
    return %c0_i32, %c0_i32_0 : i32, i32
  }
  func.func @transform_3(%arg0: i32) -> (i32, i32) {
    %c0_i32 = arith.constant 0 : i32
    %c0_i32_0 = arith.constant 0 : i32
    %c0_i32_1 = arith.constant 0 : i32
    return %c0_i32, %c0_i32_0 : i32, i32
  }
  func.func @transform_4(%arg0: i32) -> (i32, i32) {
    %c0_i32 = arith.constant 0 : i32
    %c0_i32_0 = arith.constant 0 : i32
    %c0_i32_1 = arith.constant 0 : i32
    return %c0_i32, %c0_i32_0 : i32, i32
  }
  func.func @transform_5(%arg0: i32) -> (i32, i32) {
    %c0_i32 = arith.constant 0 : i32
    %c0_i32_0 = arith.constant 0 : i32
    %c0_i32_1 = arith.constant 0 : i32
    return %c0_i32, %c0_i32_0 : i32, i32
  }
  func.func @transform_6(%arg0: i32) -> i32 {
    %c0_i32 = arith.constant 0 : i32
    %c0_i32_0 = arith.constant 0 : i32
    return %c0_i32 : i32
  }
  func.func @transform_7(%arg0: i32) -> (i32, i32) {
    %c0_i32 = arith.constant 0 : i32
    %c0_i32_0 = arith.constant 0 : i32
    return %arg0, %c0_i32 : i32, i32
  }
}

</mosaic_0001>

<llo_original>
// kernel: tpu_custom_call.1
$region0: #{tpu_custom_call.1}
  #allocation0 [shape = 'u32[]', space=smem, size = 0x4, offset = 0x4, fixed_abs, tag = 'smem constant byte address 0x4 - core index']
  #allocation1 [shape = 'u32[144,128]{1,0:T(1,128)}', space=vmem, size = 0x12000, scoped, tag = 'internal scratch']
  #allocation2 [shape = 'f32[1]{0:T(128)S(6)}', space=smem, size = 0x200, scoped, tag = 'scoped memory for tpu_custom_call.1']
  %s0 = inlined_call_operand.vmem [shape: bf16[128,32], index: 0, kind: input, shape index: {}]
  %s1 = inlined_call_operand.vmem [shape: bf16[32,128], index: 1, kind: input, shape index: {}]
  %s2 = inlined_call_operand.vmem [shape: f32[1,128], index: 2, kind: input, shape index: {}]
  %s3 = inlined_call_operand.vmem [shape: bf16[128,64], index: 3, kind: input, shape index: {}]
  %s4 = inlined_call_operand.vmem [shape: f32[1,64], index: 4, kind: input, shape index: {}]
  %s5 = inlined_call_operand.vmem [shape: f32[1,64], index: 5, kind: input, shape index: {}]
  %s6 = inlined_call_operand.<no memory space> [shape: f32[1], index: 6, kind: input, shape index: {}]
  %s7 = inlined_call_operand.hbm [shape: f32[1,128], index: 7, kind: output, shape index: {}]
  %s8 = sld [smem:[#allocation0]]
  $region38: #{tpu_custom_call.1} parent=0
    _
  %s10 = ssub.s32 1, %s8
  %s11 = scalar_select 0, %s10, %s8
  %12 = sst [smem:[#allocation2]] %s6
  $region1: #{tpu_custom_call.1} parent=0
    #allocation3 [shape = 'u8[512]{0}', space=vmem, size = 0x400, scoped, tag = 'output window, operand 0, single buffered']
    #allocation4 [shape = 's32[1]{0}', space=sflag, size = 0x4, scoped, tag = 'scoped memory for tpu_custom_call.1']
    %13 = vsyncpa [#allocation4], 0
    // Predicated region
    $region2: #{tpu_custom_call.1} parent=1 // pred_check
      _
    $region3: #{tpu_custom_call.1} parent=1 // pred_check_branch
      %15 = sbr.rel (0) target = $region5
    $region4: #{tpu_custom_call.1} parent=1 // pred_region
      _
    $region5: #{tpu_custom_call.1} parent=1 // pred_fallthru
      _
    // Predicated region
    $region6: #{tpu_custom_call.1} parent=1 // pred_check
      _
    $region7: #{tpu_custom_call.1} parent=1 // pred_check_branch
      %17 = sbr.rel (0) target = $region9
    $region8: #{tpu_custom_call.1} parent=1 // pred_region
      _
    $region9: #{tpu_custom_call.1} parent=1 // pred_fallthru
      _
    // Predicated region
    $region10: #{tpu_custom_call.1} parent=1 // pred_check
      _
    $region11: #{tpu_custom_call.1} parent=1 // pred_check_branch
      %19 = sbr.rel (0) target = $region13
    $region12: #{tpu_custom_call.1} parent=1 // pred_region
      _
    $region13: #{tpu_custom_call.1} parent=1 // pred_fallthru
      _
    // Predicated region
    $region14: #{tpu_custom_call.1} parent=1 // pred_check
      _
    $region15: #{tpu_custom_call.1} parent=1 // pred_check_branch
      %21 = sbr.rel (0) target = $region17
    $region16: #{tpu_custom_call.1} parent=1 // pred_region
      _
    $region17: #{tpu_custom_call.1} parent=1 // pred_fallthru
      _
    // Predicated region
    $region18: #{tpu_custom_call.1} parent=1 // pred_check
      _
    $region19: #{tpu_custom_call.1} parent=1 // pred_check_branch
      %23 = sbr.rel (0) target = $region21
    $region20: #{tpu_custom_call.1} parent=1 // pred_region
      _
    $region21: #{tpu_custom_call.1} parent=1 // pred_fallthru
      _
    // Predicated region
    $region22: #{tpu_custom_call.1} parent=1 // pred_check
      _
    $region23: #{tpu_custom_call.1} parent=1 // pred_check_branch
      %25 = sbr.rel (0) target = $region25
    $region24: #{tpu_custom_call.1} parent=1 // pred_region
      _
    $region25: #{tpu_custom_call.1} parent=1 // pred_fallthru
      _
    // Predicated region
    $region26: #{tpu_custom_call.1} parent=1 // pred_check
      _
    $region27: #{tpu_custom_call.1} parent=1 // pred_check_branch
      %27 = sbr.rel (0) target = $region29
    $region28: #{tpu_custom_call.1} parent=1 // pred_region
      _
    $region29: #{tpu_custom_call.1} parent=1 // pred_fallthru
      _
    %v29 = vld [vmem:[%s0] sm:$0xf]
    %v30 = vld [vmem:[%s0 + $0x4] sm:$0xf]
    %v31 = vld [vmem:[%s0 + $0x8] sm:$0xf]
    %v32 = vld [vmem:[%s0 + $0xc] sm:$0xf]
    %v33 = vld [vmem:[%s0 + $0x10] sm:$0xf]
    %v34 = vld [vmem:[%s0 + $0x14] sm:$0xf]
    %v35 = vld [vmem:[%s0 + $0x18] sm:$0xf]
    %v36 = vld [vmem:[%s0 + $0x1c] sm:$0xf]
    %v37 = vld [vmem:[%s0 + $0x20] sm:$0xf]
    %v38 = vld [vmem:[%s0 + $0x24] sm:$0xf]
    %v39 = vld [vmem:[%s0 + $0x28] sm:$0xf]
    %v40 = vld [vmem:[%s0 + $0x2c] sm:$0xf]
    %v41 = vld [vmem:[%s0 + $0x30] sm:$0xf]
    %v42 = vld [vmem:[%s0 + $0x34] sm:$0xf]
    %v43 = vld [vmem:[%s0 + $0x38] sm:$0xf]
    %v44 = vld [vmem:[%s0 + $0x3c] sm:$0xf]
    %v45 = vld [vmem:[%s1] sm:$0xf]
    %v46 = vld [vmem:[%s1 + $0x4] sm:$0xf]
    %v47 = vld [vmem:[%s1 + $0x8] sm:$0xf]
    %v48 = vld [vmem:[%s1 + $0xc] sm:$0xf]
    %v49 = vld [vmem:[%s2] sm:$0x1]
    %v51 = vlaneseq
    %v52 = vshrl.u32 %v51, 7
    %v53 = vsub.s32 0, %v52
    %v54 = vrot.slane %v49, %v53
    %v72 = vunpack.c.l.b16 %v29
    %v73 = vunpack.c.l.b16 %v30
    %v74 = vunpack.c.l.b16 %v31
    %v75 = vunpack.c.l.b16 %v32
    %v76 = vunpack.c.l.b16 %v33
    %v77 = vunpack.c.l.b16 %v34
    %v78 = vunpack.c.l.b16 %v35
    %v79 = vunpack.c.l.b16 %v36
    %v80 = vunpack.c.l.b16 %v37
    %v81 = vunpack.c.l.b16 %v38
    %v82 = vunpack.c.l.b16 %v39
    %v83 = vunpack.c.l.b16 %v40
    %v84 = vunpack.c.l.b16 %v41
    %v85 = vunpack.c.l.b16 %v42
    %v86 = vunpack.c.l.b16 %v43
    %v87 = vunpack.c.l.b16 %v44
    %v88 = vpack.c.b16 %v73, %v72
    %v89 = vpack.c.b16 %v75, %v74
    %v90 = vpack.c.b16 %v77, %v76
    %v91 = vpack.c.b16 %v79, %v78
    %v92 = vpack.c.b16 %v81, %v80
    %v93 = vpack.c.b16 %v83, %v82
    %v94 = vpack.c.b16 %v85, %v84
    %v95 = vpack.c.b16 %v87, %v86
    %v100 = vunpack.c.l.b16 %v45
    %v101 = vunpack.c.l.b16 %v46
    %v102 = vunpack.c.l.b16 %v47
    %v103 = vunpack.c.l.b16 %v48
    %v104 = vpack.c.b16 %v101, %v100
    %v105 = vpack.c.b16 %v103, %v102
    %vm108 = vcmask 261120
    %v110 = vsel %vm108, %v88, 0
    %v113 = vsel %vm108, %v89, 0
    %v116 = vsel %vm108, %v90, 0
    %v119 = vsel %vm108, %v91, 0
    %v122 = vsel %vm108, %v92, 0
    %v125 = vsel %vm108, %v93, 0
    %v128 = vsel %vm108, %v94, 0
    %v131 = vsel %vm108, %v95, 0
    %133 = vmatprep.subr.bf16.mxu0 0
    %134 = vmatpush1.bf16.msra.mxu0 %v104
    %135 = vmatprep.subr.bf16.mxu0 0
    %136 = vmatpush1.bf16.msra.mxu0 %v105
    %137 = vmatprep.subr.bf16.mxu0 0
    %138 = vmatpush1.bf16.msra.mxu0 0
    %139 = vmatprep.subr.bf16.mxu0 0
    %140 = vmatpush1.bf16.msra.mxu0 0
    %141 = vmatprep.subr.bf16.mxu0 0
    %142 = vmatpush1.bf16.msra.mxu0 0
    %143 = vmatprep.subr.bf16.mxu0 0
    %144 = vmatpush1.bf16.msra.mxu0 0
    %145 = vmatprep.subr.bf16.mxu0 0
    %146 = vmatpush1.bf16.msra.mxu0 0
    %147 = vmatprep.subr.bf16.mxu0 0
    %148 = vmatpush1.bf16.msra.mxu0 0
    %149 = vmatprep.subr.bf16.mxu0 0
    %150 = vmatpush1.bf16.msra.mxu0 0
    %151 = vmatprep.subr.bf16.mxu0 0
    %152 = vmatpush1.bf16.msra.mxu0 0
    %153 = vmatprep.subr.bf16.mxu0 0
    %154 = vmatpush1.bf16.msra.mxu0 0
    %155 = vmatprep.subr.bf16.mxu0 0
    %156 = vmatpush1.bf16.msra.mxu0 0
    %157 = vmatprep.subr.bf16.mxu0 0
    %158 = vmatpush1.bf16.msra.mxu0 0
    %159 = vmatprep.subr.bf16.mxu0 0
    %160 = vmatpush1.bf16.msra.mxu0 0
    %161 = vmatprep.subr.bf16.mxu0 0
    %162 = vmatpush1.bf16.msra.mxu0 0
    %163 = vmatprep.subr.bf16.mxu0 0
    %164 = vmatpush1.bf16.msra.mxu0 0
    %165 = vmatprep.mubr.bf16.mxu0 0
    %166 = vmatmul.mubr.bf16.gmra.mrb[0].mxu0 %v110
    %v167 = vpop.f32.mrb[0].mxu0
    %v168 = vadd.f32 %v54, %v167
    %v169 = vpop.f32.mrb[0].mxu0
    %v170 = vpop.f32.mrb[0].mxu0
    %v171 = vadd.f32 %v54, %v170
    %v172 = vpop.f32.mrb[0].mxu0
    %173 = vmatprep.mubr.bf16.mxu0 0
    %174 = vmatmul.mubr.bf16.gmra.mrb[0].mxu0 %v113
    %v175 = vpop.f32.mrb[0].mxu0
    %v176 = vadd.f32 %v54, %v175
    %v177 = vpop.f32.mrb[0].mxu0
    %v178 = vpop.f32.mrb[0].mxu0
    %v179 = vadd.f32 %v54, %v178
    %v180 = vpop.f32.mrb[0].mxu0
    %181 = vmatprep.mubr.bf16.mxu0 0
    %182 = vmatmul.mubr.bf16.gmra.mrb[0].mxu0 %v116
    %v183 = vpop.f32.mrb[0].mxu0
    %v184 = vadd.f32 %v54, %v183
    %v185 = vpop.f32.mrb[0].mxu0
    %v186 = vpop.f32.mrb[0].mxu0
    %v187 = vadd.f32 %v54, %v186
    %v188 = vpop.f32.mrb[0].mxu0
    %189 = vmatprep.mubr.bf16.mxu0 0
    %190 = vmatmul.mubr.bf16.gmra.mrb[0].mxu0 %v119
    %v191 = vpop.f32.mrb[0].mxu0
    %v192 = vadd.f32 %v54, %v191
    %v193 = vpop.f32.mrb[0].mxu0
    %v194 = vpop.f32.mrb[0].mxu0
    %v195 = vadd.f32 %v54, %v194
    %v196 = vpop.f32.mrb[0].mxu0
    %197 = vmatprep.mubr.bf16.mxu0 0
    %198 = vmatmul.mubr.bf16.gmra.mrb[0].mxu0 %v122
    %v199 = vpop.f32.mrb[0].mxu0
    %v200 = vadd.f32 %v54, %v199
    %v201 = vpop.f32.mrb[0].mxu0
    %v202 = vpop.f32.mrb[0].mxu0
    %v203 = vadd.f32 %v54, %v202
    %v204 = vpop.f32.mrb[0].mxu0
    %205 = vmatprep.mubr.bf16.mxu0 0
    %206 = vmatmul.mubr.bf16.gmra.mrb[0].mxu0 %v125
    %v207 = vpop.f32.mrb[0].mxu0
    %v208 = vadd.f32 %v54, %v207
    %v209 = vpop.f32.mrb[0].mxu0
    %v210 = vpop.f32.mrb[0].mxu0
    %v211 = vadd.f32 %v54, %v210
    %v212 = vpop.f32.mrb[0].mxu0
    %213 = vmatprep.mubr.bf16.mxu0 0
    %214 = vmatmul.mubr.bf16.gmra.mrb[0].mxu0 %v128
    %v215 = vpop.f32.mrb[0].mxu0
    %v216 = vadd.f32 %v54, %v215
    %v217 = vpop.f32.mrb[0].mxu0
    %v218 = vpop.f32.mrb[0].mxu0
    %v219 = vadd.f32 %v54, %v218
    %v220 = vpop.f32.mrb[0].mxu0
    %221 = vmatprep.mubr.bf16.mxu0 0
    %222 = vmatmul.mubr.bf16.gmra.mrb[0].mxu0 %v131
    %v223 = vpop.f32.mrb[0].mxu0
    %v224 = vadd.f32 %v54, %v223
    %v225 = vpop.f32.mrb[0].mxu0
    %v226 = vpop.f32.mrb[0].mxu0
    %v227 = vadd.f32 %v54, %v226
    %v228 = vpop.f32.mrb[0].mxu0
    %229 = vdwg.mxu0
    %v230 = vmax.f32 %v168, 0.0
    %v231 = vmax.f32 %v171, 0.0
    %v232 = vmax.f32 %v176, 0.0
    %v233 = vmax.f32 %v179, 0.0
    %v234 = vmax.f32 %v184, 0.0
    %v235 = vmax.f32 %v187, 0.0
    %v236 = vmax.f32 %v192, 0.0
    %v237 = vmax.f32 %v195, 0.0
    %v238 = vmax.f32 %v200, 0.0
    %v239 = vmax.f32 %v203, 0.0
    %v240 = vmax.f32 %v208, 0.0
    %v241 = vmax.f32 %v211, 0.0
    %v242 = vmax.f32 %v216, 0.0
    %v243 = vmax.f32 %v219, 0.0
    %v244 = vmax.f32 %v224, 0.0
    %v245 = vmax.f32 %v227, 0.0
    %v246 = vpack.c.bf16 %v231, %v230
    %v247 = vpack.c.bf16 %v233, %v232
    %v248 = vpack.c.bf16 %v235, %v234
    %v249 = vpack.c.bf16 %v237, %v236
    %v250 = vpack.c.bf16 %v239, %v238
    %v251 = vpack.c.bf16 %v241, %v240
    %v252 = vpack.c.bf16 %v243, %v242
    %v253 = vpack.c.bf16 %v245, %v244
    %v254 = vld [vmem:[%s3] sm:$0xf]
    %v255 = vld [vmem:[%s3 + $0x4] sm:$0xf]
    %v256 = vld [vmem:[%s3 + $0x8] sm:$0xf]
    %v257 = vld [vmem:[%s3 + $0xc] sm:$0xf]
    %v258 = vld [vmem:[%s3 + $0x10] sm:$0xf]
    %v259 = vld [vmem:[%s3 + $0x14] sm:$0xf]
    %v260 = vld [vmem:[%s3 + $0x18] sm:$0xf]
    %v261 = vld [vmem:[%s3 + $0x1c] sm:$0xf]
    %v262 = vld [vmem:[%s3 + $0x20] sm:$0xf]
    %v263 = vld [vmem:[%s3 + $0x24] sm:$0xf]
    %v264 = vld [vmem:[%s3 + $0x28] sm:$0xf]
    %v265 = vld [vmem:[%s3 + $0x2c] sm:$0xf]
    %v266 = vld [vmem:[%s3 + $0x30] sm:$0xf]
    %v267 = vld [vmem:[%s3 + $0x34] sm:$0xf]
    %v268 = vld [vmem:[%s3 + $0x38] sm:$0xf]
    %v269 = vld [vmem:[%s3 + $0x3c] sm:$0xf]
    %v270 = vld [vmem:[%s4] sm:$0x1]
    %v272 = vlaneseq
    %v273 = vshrl.u32 %v272, 7
    %v274 = vsub.s32 0, %v273
    %v275 = vrot.slane %v270, %v274
    %v293 = vunpack.c.l.b16 %v254
    %v294 = vunpack.c.l.b16 %v255
    %v295 = vunpack.c.l.b16 %v256
    %v296 = vunpack.c.l.b16 %v257
    %v297 = vunpack.c.l.b16 %v258
    %v298 = vunpack.c.l.b16 %v259
    %v299 = vunpack.c.l.b16 %v260
    %v300 = vunpack.c.l.b16 %v261
    %v301 = vunpack.c.l.b16 %v262
    %v302 = vunpack.c.l.b16 %v263
    %v303 = vunpack.c.l.b16 %v264
    %v304 = vunpack.c.l.b16 %v265
    %v305 = vunpack.c.l.b16 %v266
    %v306 = vunpack.c.l.b16 %v267
    %v307 = vunpack.c.l.b16 %v268
    %v308 = vunpack.c.l.b16 %v269
    %v309 = vpack.c.b16 %v294, %v293
    %v310 = vpack.c.b16 %v296, %v295
    %v311 = vpack.c.b16 %v298, %v297
    %v312 = vpack.c.b16 %v300, %v299
    %v313 = vpack.c.b16 %v302, %v301
    %v314 = vpack.c.b16 %v304, %v303
    %v315 = vpack.c.b16 %v306, %v305
    %v316 = vpack.c.b16 %v308, %v307
    %325 = vmatprep.subr.bf16.mxu0 0
    %326 = vmatpush1.bf16.msra.mxu0 %v309
    %327 = vmatprep.subr.bf16.mxu0 0
    %328 = vmatpush1.bf16.msra.mxu0 %v310
    %329 = vmatprep.subr.bf16.mxu0 0
    %330 = vmatpush1.bf16.msra.mxu0 %v311
    %331 = vmatprep.subr.bf16.mxu0 0
    %332 = vmatpush1.bf16.msra.mxu0 %v312
    %333 = vmatprep.subr.bf16.mxu0 0
    %334 = vmatpush1.bf16.msra.mxu0 %v313
    %335 = vmatprep.subr.bf16.mxu0 0
    %336 = vmatpush1.bf16.msra.mxu0 %v314
    %337 = vmatprep.subr.bf16.mxu0 0
    %338 = vmatpush1.bf16.msra.mxu0 %v315
    %339 = vmatprep.subr.bf16.mxu0 0
    %340 = vmatpush1.bf16.msra.mxu0 %v316
    %341 = vmatprep.subr.bf16.mxu0 0
    %342 = vmatpush1.bf16.msra.mxu0 0
    %343 = vmatprep.subr.bf16.mxu0 0
    %344 = vmatpush1.bf16.msra.mxu0 0
    %345 = vmatprep.subr.bf16.mxu0 0
    %346 = vmatpush1.bf16.msra.mxu0 0
    %347 = vmatprep.subr.bf16.mxu0 0
    %348 = vmatpush1.bf16.msra.mxu0 0
    %349 = vmatprep.subr.bf16.mxu0 0
    %350 = vmatpush1.bf16.msra.mxu0 0
    %351 = vmatprep.subr.bf16.mxu0 0
    %352 = vmatpush1.bf16.msra.mxu0 0
    %353 = vmatprep.subr.bf16.mxu0 0
    %354 = vmatpush1.bf16.msra.mxu0 0
    %355 = vmatprep.subr.bf16.mxu0 0
    %356 = vmatpush1.bf16.msra.mxu0 0
    %357 = vmatprep.mubr.bf16.mxu0 0
    %358 = vmatmul.mubr.bf16.gmra.mrb[0].mxu0 %v246
    %v359 = vpop.f32.mrb[0].mxu0
    %v360 = vadd.f32 %v275, %v359
    %v361 = vpop.f32.mrb[0].mxu0
    %v362 = vpop.f32.mrb[0].mxu0
    %v363 = vadd.f32 %v275, %v362
    %v364 = vpop.f32.mrb[0].mxu0
    %365 = vmatprep.mubr.bf16.mxu0 0
    %366 = vmatmul.mubr.bf16.gmra.mrb[0].mxu0 %v247
    %v367 = vpop.f32.mrb[0].mxu0
    %v368 = vadd.f32 %v275, %v367
    %v369 = vpop.f32.mrb[0].mxu0
    %v370 = vpop.f32.mrb[0].mxu0
    %v371 = vadd.f32 %v275, %v370
    %v372 = vpop.f32.mrb[0].mxu0
    %373 = vmatprep.mubr.bf16.mxu0 0
    %374 = vmatmul.mubr.bf16.gmra.mrb[0].mxu0 %v248
    %v375 = vpop.f32.mrb[0].mxu0
    %v376 = vadd.f32 %v275, %v375
    %v377 = vpop.f32.mrb[0].mxu0
    %v378 = vpop.f32.mrb[0].mxu0
    %v379 = vadd.f32 %v275, %v378
    %v380 = vpop.f32.mrb[0].mxu0
    %381 = vmatprep.mubr.bf16.mxu0 0
    %382 = vmatmul.mubr.bf16.gmra.mrb[0].mxu0 %v249
    %v383 = vpop.f32.mrb[0].mxu0
    %v384 = vadd.f32 %v275, %v383
    %v385 = vpop.f32.mrb[0].mxu0
    %v386 = vpop.f32.mrb[0].mxu0
    %v387 = vadd.f32 %v275, %v386
    %v388 = vpop.f32.mrb[0].mxu0
    %389 = vmatprep.mubr.bf16.mxu0 0
    %390 = vmatmul.mubr.bf16.gmra.mrb[0].mxu0 %v250
    %v391 = vpop.f32.mrb[0].mxu0
    %v392 = vadd.f32 %v275, %v391
    %v393 = vpop.f32.mrb[0].mxu0
    %v394 = vpop.f32.mrb[0].mxu0
    %v395 = vadd.f32 %v275, %v394
    %v396 = vpop.f32.mrb[0].mxu0
    %397 = vmatprep.mubr.bf16.mxu0 0
    %398 = vmatmul.mubr.bf16.gmra.mrb[0].mxu0 %v251
    %v399 = vpop.f32.mrb[0].mxu0
    %v400 = vadd.f32 %v275, %v399
    %v401 = vpop.f32.mrb[0].mxu0
    %v402 = vpop.f32.mrb[0].mxu0
    %v403 = vadd.f32 %v275, %v402
    %v404 = vpop.f32.mrb[0].mxu0
    %405 = vmatprep.mubr.bf16.mxu0 0
    %406 = vmatmul.mubr.bf16.gmra.mrb[0].mxu0 %v252
    %v407 = vpop.f32.mrb[0].mxu0
    %v408 = vadd.f32 %v275, %v407
    %v409 = vpop.f32.mrb[0].mxu0
    %v410 = vpop.f32.mrb[0].mxu0
    %v411 = vadd.f32 %v275, %v410
    %v412 = vpop.f32.mrb[0].mxu0
    %413 = vmatprep.mubr.bf16.mxu0 0
    %414 = vmatmul.mubr.bf16.gmra.mrb[0].mxu0 %v253
    %v415 = vpop.f32.mrb[0].mxu0
    %v416 = vadd.f32 %v275, %v415
    %v417 = vpop.f32.mrb[0].mxu0
    %v418 = vpop.f32.mrb[0].mxu0
    %v419 = vadd.f32 %v275, %v418
    %v420 = vpop.f32.mrb[0].mxu0
    %421 = vdwg.mxu0
    %v422 = vmax.f32 %v360, 0.0
    %v423 = vmax.f32 %v363, 0.0
    %v424 = vmax.f32 %v368, 0.0
    %v425 = vmax.f32 %v371, 0.0
    %v426 = vmax.f32 %v376, 0.0
    %v427 = vmax.f32 %v379, 0.0
    %v428 = vmax.f32 %v384, 0.0
    %v429 = vmax.f32 %v387, 0.0
    %v430 = vmax.f32 %v392, 0.0
    %v431 = vmax.f32 %v395, 0.0
    %v432 = vmax.f32 %v400, 0.0
    %v433 = vmax.f32 %v403, 0.0
    %v434 = vmax.f32 %v408, 0.0
    %v435 = vmax.f32 %v411, 0.0
    %v436 = vmax.f32 %v416, 0.0
    %v437 = vmax.f32 %v419, 0.0
    %v438 = vld [vmem:[%s5] sm:$0x1]
    %v440 = vlaneseq
    %v441 = vshrl.u32 %v440, 7
    %v442 = vsub.s32 0, %v441
    %v443 = vrot.slane %v438, %v442
    %v445 = vmul.f32 %v422, %v443
    %v446 = vmul.f32 %v423, %v443
    %v447 = vmul.f32 %v424, %v443
    %v448 = vmul.f32 %v425, %v443
    %v449 = vmul.f32 %v426, %v443
    %v450 = vmul.f32 %v427, %v443
    %v451 = vmul.f32 %v428, %v443
    %v452 = vmul.f32 %v429, %v443
    %v453 = vmul.f32 %v430, %v443
    %v454 = vmul.f32 %v431, %v443
    %v455 = vmul.f32 %v432, %v443
    %v456 = vmul.f32 %v433, %v443
    %v457 = vmul.f32 %v434, %v443
    %v458 = vmul.f32 %v435, %v443
    %v459 = vmul.f32 %v436, %v443
    %v460 = vmul.f32 %v437, %v443
    %vm461 = vcmask 523264
    %v462 = vsel %vm461, %v445, 0.0
    %463 = vadd.xlane.f32.xlu0 %v462
    %v464 = vpop.xlane.xlu0 %463
    %v465 = vsel %vm461, %v446, 0.0
    %466 = vadd.xlane.f32.xlu0 %v465
    %v467 = vpop.xlane.xlu0 %466
    %v468 = vsel %vm461, %v447, 0.0
    %469 = vadd.xlane.f32.xlu0 %v468
    %v470 = vpop.xlane.xlu0 %469
    %v471 = vsel %vm461, %v448, 0.0
    %472 = vadd.xlane.f32.xlu0 %v471
    %v473 = vpop.xlane.xlu0 %472
    %v474 = vsel %vm461, %v449, 0.0
    %475 = vadd.xlane.f32.xlu0 %v474
    %v476 = vpop.xlane.xlu0 %475
    %v477 = vsel %vm461, %v450, 0.0
    %478 = vadd.xlane.f32.xlu0 %v477
    %v479 = vpop.xlane.xlu0 %478
    %v480 = vsel %vm461, %v451, 0.0
    %481 = vadd.xlane.f32.xlu0 %v480
    %v482 = vpop.xlane.xlu0 %481
    %v483 = vsel %vm461, %v452, 0.0
    %484 = vadd.xlane.f32.xlu0 %v483
    %v485 = vpop.xlane.xlu0 %484
    %v486 = vsel %vm461, %v453, 0.0
    %487 = vadd.xlane.f32.xlu0 %v486
    %v488 = vpop.xlane.xlu0 %487
    %v489 = vsel %vm461, %v454, 0.0
    %490 = vadd.xlane.f32.xlu0 %v489
    %v491 = vpop.xlane.xlu0 %490
    %v492 = vsel %vm461, %v455, 0.0
    %493 = vadd.xlane.f32.xlu0 %v492
    %v494 = vpop.xlane.xlu0 %493
    %v495 = vsel %vm461, %v456, 0.0
    %496 = vadd.xlane.f32.xlu0 %v495
    %v497 = vpop.xlane.xlu0 %496
    %v498 = vsel %vm461, %v457, 0.0
    %499 = vadd.xlane.f32.xlu0 %v498
    %v500 = vpop.xlane.xlu0 %499
    %v501 = vsel %vm461, %v458, 0.0
    %502 = vadd.xlane.f32.xlu0 %v501
    %v503 = vpop.xlane.xlu0 %502
    %v504 = vsel %vm461, %v459, 0.0
    %505 = vadd.xlane.f32.xlu0 %v504
    %v506 = vpop.xlane.xlu0 %505
    %v507 = vsel %vm461, %v460, 0.0
    %508 = vadd.xlane.f32.xlu0 %v507
    %v509 = vpop.xlane.xlu0 %508
    %s510 = sld [smem:[#allocation2]]
    %v511 = vstv %s510
    %v512 = vadd.f32 %v464, %v511
    %v513 = vadd.f32 %v467, %v511
    %v514 = vadd.f32 %v470, %v511
    %v515 = vadd.f32 %v473, %v511
    %v516 = vadd.f32 %v476, %v511
    %v517 = vadd.f32 %v479, %v511
    %v518 = vadd.f32 %v482, %v511
    %v519 = vadd.f32 %v485, %v511
    %v520 = vadd.f32 %v488, %v511
    %v521 = vadd.f32 %v491, %v511
    %v522 = vadd.f32 %v494, %v511
    %v523 = vadd.f32 %v497, %v511
    %v524 = vadd.f32 %v500, %v511
    %v525 = vadd.f32 %v503, %v511
    %v526 = vadd.f32 %v506, %v511
    %v527 = vadd.f32 %v509, %v511
    %v544 = vlaneseq
    %v545 = vand.u32 %v544, 127
    %v546 = vlaneseq
    %v547 = vshrl.u32 %v546, 7
    %v548 = vsub.s32 %v545, %v547
    %v549 = vrot.slane %v512, %v548
    %v550 = vadd.s32 %v545, 4294967288
    %v551 = vlaneseq
    %v552 = vshrl.u32 %v551, 7
    %v553 = vsub.s32 %v550, %v552
    %v554 = vrot.slane %v513, %v553
    %vm555 = vcmask 130112
    %v556 = vsel %vm555, %v554, %v549
    %v557 = vadd.s32 %v545, 4294967280
    %v558 = vlaneseq
    %v559 = vshrl.u32 %v558, 7
    %v560 = vsub.s32 %v557, %v559
    %v561 = vrot.slane %v514, %v560
    %vm562 = vcmask 195712
    %v563 = vsel %vm562, %v561, %v556
    %v564 = vadd.s32 %v545, 4294967272
    %v565 = vlaneseq
    %v566 = vshrl.u32 %v565, 7
    %v567 = vsub.s32 %v564, %v566
    %v568 = vrot.slane %v515, %v567
    %vm569 = vcmask 261312
    %v570 = vsel %vm569, %v568, %v563
    %v571 = vadd.s32 %v545, 4294967264
    %v572 = vlaneseq
    %v573 = vshrl.u32 %v572, 7
    %v574 = vsub.s32 %v571, %v573
    %v575 = vrot.slane %v516, %v574
    %vm576 = vcmask 326912
    %v577 = vsel %vm576, %v575, %v570
    %v578 = vadd.s32 %v545, 4294967256
    %v579 = vlaneseq
    %v580 = vshrl.u32 %v579, 7
    %v581 = vsub.s32 %v578, %v580
    %v582 = vrot.slane %v517, %v581
    %vm583 = vcmask 392512
    %v584 = vsel %vm583, %v582, %v577
    %v585 = vadd.s32 %v545, 4294967248
    %v586 = vlaneseq
    %v587 = vshrl.u32 %v586, 7
    %v588 = vsub.s32 %v585, %v587
    %v589 = vrot.slane %v518, %v588
    %vm590 = vcmask 458112
    %v591 = vsel %vm590, %v589, %v584
    %v592 = vadd.s32 %v545, 4294967240
    %v593 = vlaneseq
    %v594 = vshrl.u32 %v593, 7
    %v595 = vsub.s32 %v592, %v594
    %v596 = vrot.slane %v519, %v595
    %vm597 = vcmask 523712
    %v598 = vsel %vm597, %v596, %v591
    %v599 = vadd.s32 %v545, 4294967232
    %v600 = vlaneseq
    %v601 = vshrl.u32 %v600, 7
    %v602 = vsub.s32 %v599, %v601
    %v603 = vrot.slane %v520, %v602
    %vm604 = vcmask 589312
    %v605 = vsel %vm604, %v603, %v598
    %v606 = vadd.s32 %v545, 4294967224
    %v607 = vlaneseq
    %v608 = vshrl.u32 %v607, 7
    %v609 = vsub.s32 %v606, %v608
    %v610 = vrot.slane %v521, %v609
    %vm611 = vcmask 654912
    %v612 = vsel %vm611, %v610, %v605
    %v613 = vadd.s32 %v545, 4294967216
    %v614 = vlaneseq
    %v615 = vshrl.u32 %v614, 7
    %v616 = vsub.s32 %v613, %v615
    %v617 = vrot.slane %v522, %v616
    %vm618 = vcmask 720512
    %v619 = vsel %vm618, %v617, %v612
    %v620 = vadd.s32 %v545, 4294967208
    %v621 = vlaneseq
    %v622 = vshrl.u32 %v621, 7
    %v623 = vsub.s32 %v620, %v622
    %v624 = vrot.slane %v523, %v623
    %vm625 = vcmask 786112
    %v626 = vsel %vm625, %v624, %v619
    %v627 = vadd.s32 %v545, 4294967200
    %v628 = vlaneseq
    %v629 = vshrl.u32 %v628, 7
    %v630 = vsub.s32 %v627, %v629
    %v631 = vrot.slane %v524, %v630
    %vm632 = vcmask 851712
    %v633 = vsel %vm632, %v631, %v626
    %v634 = vadd.s32 %v545, 4294967192
    %v635 = vlaneseq
    %v636 = vshrl.u32 %v635, 7
    %v637 = vsub.s32 %v634, %v636
    %v638 = vrot.slane %v525, %v637
    %vm639 = vcmask 917312
    %v640 = vsel %vm639, %v638, %v633
    %v641 = vadd.s32 %v545, 4294967184
    %v642 = vlaneseq
    %v643 = vshrl.u32 %v642, 7
    %v644 = vsub.s32 %v641, %v643
    %v645 = vrot.slane %v526, %v644
    %vm646 = vcmask 982912
    %v647 = vsel %vm646, %v645, %v640
    %v648 = vadd.s32 %v545, 4294967176
    %v649 = vlaneseq
    %v650 = vshrl.u32 %v649, 7
    %v651 = vsub.s32 %v648, %v650
    %v652 = vrot.slane %v527, %v651
    %vm653 = vcmask 1048512
    %v654 = vsel %vm653, %v652, %v647
    %656 = vst [vmem:[#allocation3] sm:$0x1] %v654
    // Predicated region
    $region30: #{tpu_custom_call.1} parent=1 // pred_check
      _
    $region31: #{tpu_custom_call.1} parent=1 // pred_check_branch
      %658 = sbr.rel (0) target = $region33
    $region32: #{tpu_custom_call.1} parent=1 // pred_region
      %s660 = ssub.s32 16, 16
      %661 = vsyncadd [#allocation4], %s660
      %s663 = sshll.u32 [#allocation3], 4
      %s664 = int_to_ptr.vmem [resolvable:$true] %s663
      %666 = dma.vmem_to_hbm [thread:$0]  %s664, 16, %s7, [#allocation4]
    $region33: #{tpu_custom_call.1} parent=1 // pred_fallthru
      _
    // Predicated region
    $region34: #{tpu_custom_call.1} parent=1 // pred_check
      _
    $region35: #{tpu_custom_call.1} parent=1 // pred_check_branch
      %668 = sbr.rel (0) target = $region37
    $region36: #{tpu_custom_call.1} parent=1 // pred_region
      %669 = dma.done [#allocation4], 16
    $region37: #{tpu_custom_call.1} parent=1 // pred_fallthru
      _
    %670 = vsyncpa [#allocation4], 1

</llo_original>
